<compile_context>
chip_gen: v5e
topology: v5e:2x2
jax: 0.10.0
libtpu: 0.0.40
codegen_flags: <defaults>
</compile_context>

<pallas_src>
import functools

import jax
import jax.numpy as jnp
import numpy as np
from jax.experimental import pallas as pl
from jax.experimental.pallas import tpu as pltpu

ROWS = 7        # [global avg, global max, 5 adaptive-avg-pool bins]
ROWS_PAD = 8    # pad descriptor rows to a sublane multiple
BINS = 5        # AdaptiveAvgPool1d(5)


def _pool_matrix(L: int) -> np.ndarray:
    """(ROWS_PAD, L) matrix mapping an ascending-sorted length-L sequence to
    [global avg, global max, AdaptiveAvgPool1d(5) bin averages, 0]."""
    m = np.zeros((ROWS_PAD, L), np.float32)
    m[0, :] = 1.0 / L                      # global average (permutation invariant)
    m[1, L - 1] = 1.0                      # max == last element of sorted sequence
    for i in range(BINS):                  # PyTorch adaptive pooling bin bounds
        s = (i * L) // BINS
        e = ((i + 1) * L + BINS - 1) // BINS
        m[2 + i, s:e] = 1.0 / (e - s)
    return m


def _choose_bblk(B, C, L, itemsize, target_bytes=2 << 20):
    """Largest batch sub-block that divides B, keeps the streamed block under
    ~2 MiB, and leaves >= 2 grid steps (so both v7x TensorCores get work)."""
    per_elem = C * L * itemsize
    best = 1
    for d in range(1, B + 1):
        if B % d:
            continue
        if d * per_elem > target_bytes:
            continue
        if B >= 2 and B // d < 2:
            continue
        best = d
    return best


def _channel_attention_kernel(xs_ref, poolT_ref, w1p_ref, w2p_ref, wconv_ref,
                              bias_ref, o_ref, *, flat_pool):
    # xs_ref:    (Bblk, C, L)  ascending-sorted activations, streamed in input dtype
    # poolT_ref: (L, 8)        pooling matrix^T (cols: avg, max, 5 bins, 0 pad)
    # w1p_ref:   (CH_PAD, C)   1st 1x1 conv weights, hidden dim zero-padded to 128
    # w2p_ref:   (C, CH_PAD)   2nd 1x1 conv weights, hidden dim zero-padded
    # wconv_ref: (1, 8)        Conv1d(7,1,1) weights as a row (+ zero pad)
    # bias_ref:  (1,) in SMEM  Conv1d bias
    # o_ref:     (1, C, Bblk)  sigmoid channel attention, channels on sublanes
    Bblk, C, L = xs_ref.shape

    if flat_pool:
        # One MXU matmul produces all 7 descriptors for every batch element in the
        # block: (Bblk*C, L) @ (L, 8).  Channels stay on sublanes; no transposes.
        descT = jnp.dot(xs_ref[...].reshape(Bblk * C, L), poolT_ref[...],
                        preferred_element_type=jnp.float32)            # (Bblk*C, 8)
        desc_cols = [descT[b * C:(b + 1) * C, :] for b in range(Bblk)]
    else:
        desc_cols = [jnp.dot(xs_ref[b], poolT_ref[...],
                             preferred_element_type=jnp.float32)
                     for b in range(Bblk)]                              # (C, 8) each

    outs = []
    for dT in desc_cols:                                   # dT: (C, 8)
        # shared_MLP conv1 + ReLU (transposed: channels stay on sublanes).
        hT = jnp.maximum(
            jnp.dot(w1p_ref[...], dT, preferred_element_type=jnp.float32),
            0.0)                                                        # (CH_PAD, 8)
        # Conv1d(7->1, k=1) is linear -> fold it before the 2nd 1x1 conv:
        #   sum_j w[j] * (W2 @ h_j)  ==  W2 @ (sum_j w[j] * h_j)
        hcT = jnp.sum(hT * wconv_ref[...], axis=1, keepdims=True)       # (CH_PAD, 1)
        yT = jnp.dot(w2p_ref[...], hcT,
                     preferred_element_type=jnp.float32)                # (C, 1)
        outs.append(yT)

    z = (outs[0] if Bblk == 1 else jnp.concatenate(outs, axis=1)) + bias_ref[0]
    o_ref[0] = 1.0 / (1.0 + jnp.exp(-z))                                # sigmoid


@jax.jit
def channel_attention(x, w1, w2, wconv, wconv_bias):
    """ChannelAttention forward. x: (B, C, H, W) -> (B, C, 1, 1) sigmoid weights."""
    B, C, H, W = x.shape
    L = H * W
    CH = w1.shape[0]                                  # in_planes // ratio
    CH_PAD = max(128, ((CH + 127) // 128) * 128)      # lane-dense hidden dim

    # ---- glue in plain JAX (sort only; no transpose, no dtype upcast) ------
    # TODO(synk): the sort itself stays in XLA; no clean Pallas TPU sort primitive.
    xs = jnp.sort(x.reshape(B, C, L), axis=-1)        # (B, C, L), input dtype
    itemsize = xs.dtype.itemsize

    poolT = jnp.asarray(_pool_matrix(L).T).astype(xs.dtype)             # (L, 8)
    w1p = jnp.zeros((CH_PAD, C), jnp.float32).at[:CH, :].set(
        w1.reshape(CH, C).astype(jnp.float32))
    w2p = jnp.zeros((C, CH_PAD), jnp.float32).at[:, :CH].set(
        w2.reshape(C, CH).astype(jnp.float32))
    wconv_row = jnp.zeros((1, ROWS_PAD), jnp.float32).at[0, :ROWS].set(
        wconv.reshape(ROWS).astype(jnp.float32))
    bias = wconv_bias.reshape(1).astype(jnp.float32)

    Bblk = _choose_bblk(B, C, L, itemsize)
    G = B // Bblk

    # The free in-kernel (Bblk, C, L) -> (Bblk*C, L) reshape needs C to be a
    # multiple of the packed sublane count for the streamed dtype.
    sub = 8 * max(1, 4 // itemsize) if itemsize <= 4 else 8
    flat_pool = (itemsize <= 4) and (C % sub == 0)

    block_bytes = Bblk * C * L * itemsize
    fixed_bytes = itemsize * L * ROWS_PAD + 4 * (2 * C * CH_PAD + ROWS_PAD)
    vmem_limit = int(min(64 << 20,
                         max(32 << 20, 4 * block_bytes + 4 * fixed_bytes + (2 << 20))))

    flops = B * 2 * (C * L * ROWS_PAD + CH_PAD * C * ROWS_PAD
                     + CH_PAD * ROWS_PAD + C * CH_PAD)
    bytes_accessed = (B * C * L + L * ROWS_PAD) * itemsize + 4 * (2 * C * CH_PAD + B * C)

    kernel = functools.partial(_channel_attention_kernel, flat_pool=flat_pool)

    out = pl.pallas_call(
        kernel,
        out_shape=jax.ShapeDtypeStruct((G, C, Bblk), jnp.float32),
        grid_spec=pltpu.PrefetchScalarGridSpec(
            num_scalar_prefetch=0,
            grid=(G,),                                           # pipelined over batch
            in_specs=[
                pl.BlockSpec((Bblk, C, L), lambda i: (i, 0, 0)),    # sorted activations
                pl.BlockSpec((L, ROWS_PAD), lambda i: (0, 0)),      # pooling matrix^T
                pl.BlockSpec((CH_PAD, C), lambda i: (0, 0)),        # MLP conv1
                pl.BlockSpec((C, CH_PAD), lambda i: (0, 0)),        # MLP conv2
                pl.BlockSpec((1, ROWS_PAD), lambda i: (0, 0)),      # conv1d weights
                pl.BlockSpec(memory_space=pltpu.MemorySpace.SMEM),  # conv1d bias
            ],
            out_specs=pl.BlockSpec((1, C, Bblk), lambda i: (i, 0, 0)),
        ),
        compiler_params=pltpu.CompilerParams(
            dimension_semantics=("parallel",),     # shard batch grid across TCs
            vmem_limit_bytes=vmem_limit,
        ),
        cost_estimate=pl.CostEstimate(
            flops=flops, transcendentals=B * C, bytes_accessed=bytes_accessed),
    )(xs, poolT, w1p, w2p, wconv_row, bias)

    # (G, C, Bblk) -> (B, C, 1, 1); tiny tensor, negligible.
    return out.transpose(0, 2, 1).reshape(B, C, 1, 1)


def _reference(x, w1, w2, wconv, bias):
    """Pure-JAX reference matching the PyTorch module's forward."""
    B, C, H, W = x.shape
    L = H * W
    CH = w1.shape[0]
    hp = jax.lax.Precision.HIGHEST
    w1m = w1.reshape(CH, C)
    w2m = w2.reshape(C, CH)

    def mlp(v):                                   # v: (B, C) -> (B, C)
        h = jnp.maximum(jnp.einsum("hc,bc->bh", w1m, v, precision=hp), 0.0)
        return jnp.einsum("ch,bh->bc", w2m, h, precision=hp)

    xf = x.reshape(B, C, L)
    xs = jnp.sort(xf, axis=-1)
    rows = [mlp(jnp.mean(xf, axis=-1)), mlp(jnp.max(xf, axis=-1))]
    for i in range(BINS):
        s = (i * L) // BINS
        e = ((i + 1) * L + BINS - 1) // BINS
        rows.append(mlp(jnp.mean(xs[:, :, s:e], axis=-1)))
    stacked = jnp.stack(rows, axis=1)             # (B, 7, C)
    out = jnp.einsum("j,bjc->bc", wconv.reshape(ROWS), stacked, precision=hp)
    out = out + bias.reshape(())
    return jax.nn.sigmoid(out).reshape(B, C, 1, 1)


if __name__ == "__main__":
    key = jax.random.PRNGKey(0)
    kx, k1, k2, k3, k4 = jax.random.split(key, 5)

    # Small shapes consistent with the module: in_planes=32, ratio=16 -> hidden=2.
    B, C, H, W = 2, 32, 16, 16
    RATIO = 16
    CH = C // RATIO

    x = jax.random.normal(kx, (B, C, H, W), dtype=jnp.float32)
    w1 = jax.random.normal(k1, (CH, C, 1, 1), jnp.float32) * (1.0 / (C ** 0.5))
    w2 = jax.random.normal(k2, (C, CH, 1, 1), jnp.float32) * (1.0 / (CH ** 0.5))
    wconv = jax.random.normal(k3, (1, ROWS, 1), jnp.float32) * (1.0 / (ROWS ** 0.5))
    bconv = jax.random.normal(k4, (1,), jnp.float32) * 0.1

    # f32 inputs: exact path, tight tolerance.
    out = channel_attention(x, w1, w2, wconv, bconv)
    jax.block_until_ready(out)
    assert out.shape == (B, C, 1, 1), out.shape
    ref = _reference(x, w1, w2, wconv, bconv)
    np.testing.assert_allclose(np.asarray(out), np.asarray(ref),
                               rtol=2e-3, atol=2e-3)

    # bf16 inputs: halved HBM streaming of the big tensor; compare against the
    # f32-math reference evaluated on the same bf16-quantized input.
    x16 = x.astype(jnp.bfloat16)
    out16 = channel_attention(x16, w1, w2, wconv, bconv)
    jax.block_until_ready(out16)
    ref16 = _reference(x16.astype(jnp.float32), w1, w2, wconv, bconv)
    np.testing.assert_allclose(np.asarray(out16), np.asarray(ref16),
                               rtol=3e-2, atol=3e-2)

    print("KERNEL_OK")
</pallas_src>

<mosaic_0001>
module attributes {stable_mosaic.version = 11 : i64} {
  func.func @_channel_attention_kernel(%arg0: i32, %arg1: memref<1x32x256xf32, #tpu.memory_space<vmem>>, %arg2: memref<256x8xf32, #tpu.memory_space<vmem>>, %arg3: memref<128x32xf32, #tpu.memory_space<vmem>>, %arg4: memref<32x128xf32, #tpu.memory_space<vmem>>, %arg5: memref<1x8xf32, #tpu.memory_space<vmem>>, %arg6: memref<1xf32, #tpu.memory_space<smem>>, %arg7: memref<1x32x1xf32, #tpu.memory_space<vmem>>) attributes {dimension_semantics = [#tpu.dimension_semantics<parallel>], iteration_bounds = array<i64: 2>, scalar_prefetch = 0 : i64, scratch_operands = 0 : i64, tpu.core_type = #tpu.core_type<tc>, window_params = [{transform_indices = @transform_0, window_bounds = array<i64: 1, 32, 256>}, {pipeline_mode = #tpu.pipeline_mode<synchronous>, transform_indices = @transform_1, window_bounds = array<i64: 256, 8>}, {pipeline_mode = #tpu.pipeline_mode<synchronous>, transform_indices = @transform_2, window_bounds = array<i64: 128, 32>}, {pipeline_mode = #tpu.pipeline_mode<synchronous>, transform_indices = @transform_3, window_bounds = array<i64: 32, 128>}, {pipeline_mode = #tpu.pipeline_mode<synchronous>, transform_indices = @transform_4, window_bounds = array<i64: 1, 8>}, {transform_indices = @transform_5, window_bounds = array<i64: 1>}, {transform_indices = @transform_6, window_bounds = array<i64: 1, 32, 1>}]} {
    %c0 = arith.constant 0 : index
    %c0_0 = arith.constant 0 : index
    %c0_1 = arith.constant 0 : index
    %0 = vector.load %arg1[%c0, %c0_0, %c0_1] : memref<1x32x256xf32, #tpu.memory_space<vmem>>, vector<1x32x256xf32>
    %1 = vector.shape_cast %0 : vector<1x32x256xf32> to vector<32x256xf32>
    %c0_2 = arith.constant 0 : index
    %c0_3 = arith.constant 0 : index
    %2 = vector.load %arg2[%c0_2, %c0_3] : memref<256x8xf32, #tpu.memory_space<vmem>>, vector<256x8xf32>
    %cst = arith.constant dense<0.000000e+00> : vector<32x8xf32>
    %3 = tpu.matmul %1, %2, %cst {dimension_numbers = #tpu.dot_dimension_numbers<[1], [0], [0], [1], [0, 0, 1, 1], [], []>} : vector<32x256xf32>, vector<256x8xf32>, vector<32x8xf32> -> vector<32x8xf32>
    %c0_4 = arith.constant 0 : index
    %c0_5 = arith.constant 0 : index
    %4 = vector.load %arg3[%c0_4, %c0_5] : memref<128x32xf32, #tpu.memory_space<vmem>>, vector<128x32xf32>
    %cst_6 = arith.constant dense<0.000000e+00> : vector<128x8xf32>
    %5 = tpu.matmul %4, %3, %cst_6 {dimension_numbers = #tpu.dot_dimension_numbers<[1], [0], [0], [1], [0, 0, 1, 1], [], []>} : vector<128x32xf32>, vector<32x8xf32>, vector<128x8xf32> -> vector<128x8xf32>
    %cst_7 = arith.constant 0.000000e+00 : f32
    %6 = vector.broadcast %cst_7 : f32 to vector<128x8xf32>
    %7 = arith.maximumf %5, %6 : vector<128x8xf32>
    %c0_8 = arith.constant 0 : index
    %c0_9 = arith.constant 0 : index
    %8 = vector.load %arg5[%c0_8, %c0_9] : memref<1x8xf32, #tpu.memory_space<vmem>>, vector<1x8xf32>
    %9 = vector.broadcast %8 : vector<1x8xf32> to vector<128x8xf32>
    %10 = arith.mulf %7, %9 : vector<128x8xf32>
    %cst_10 = arith.constant dense<0.000000e+00> : vector<128xf32>
    %11 = vector.multi_reduction <add>, %10, %cst_10 [1] : vector<128x8xf32> to vector<128xf32>
    %12 = vector.shape_cast %11 : vector<128xf32> to vector<128x1xf32>
    %c0_11 = arith.constant 0 : index
    %c0_12 = arith.constant 0 : index
    %13 = vector.load %arg4[%c0_11, %c0_12] : memref<32x128xf32, #tpu.memory_space<vmem>>, vector<32x128xf32>
    %cst_13 = arith.constant dense<0.000000e+00> : vector<32x1xf32>
    %14 = tpu.matmul %13, %12, %cst_13 {dimension_numbers = #tpu.dot_dimension_numbers<[1], [0], [0], [1], [0, 0, 1, 1], [], []>} : vector<32x128xf32>, vector<128x1xf32>, vector<32x1xf32> -> vector<32x1xf32>
    %c0_14 = arith.constant 0 : index
    %15 = memref.load %arg6[%c0_14] : memref<1xf32, #tpu.memory_space<smem>>
    %16 = vector.broadcast %15 : f32 to vector<32x1xf32>
    %17 = arith.addf %14, %16 : vector<32x1xf32>
    %cst_15 = arith.constant 0.000000e+00 : f32
    %18 = vector.broadcast %cst_15 : f32 to vector<32x1xf32>
    %19 = arith.subf %18, %17 : vector<32x1xf32>
    %20 = math.exp %19 : vector<32x1xf32>
    %cst_16 = arith.constant 1.000000e+00 : f32
    %21 = vector.broadcast %cst_16 : f32 to vector<32x1xf32>
    %22 = arith.addf %21, %20 : vector<32x1xf32>
    %cst_17 = arith.constant 1.000000e+00 : f32
    %23 = vector.broadcast %cst_17 : f32 to vector<32x1xf32>
    %24 = arith.divf %23, %22 : vector<32x1xf32>
    %c0_18 = arith.constant 0 : index
    %c0_19 = arith.constant 0 : index
    %c0_20 = arith.constant 0 : index
    %25 = vector.load %arg7[%c0_18, %c0_19, %c0_20] : memref<1x32x1xf32, #tpu.memory_space<vmem>>, vector<1x32x1xf32>
    %26 = vector.shape_cast %25 : vector<1x32x1xf32> to vector<32x1xf32>
    %27 = vector.shape_cast %24 : vector<32x1xf32> to vector<1x32x1xf32>
    tpu.vector_store %arg7[%c0_18, %c0_19, %c0_20], %27 {strides = array<i32>} : memref<1x32x1xf32, #tpu.memory_space<vmem>>, vector<1x32x1xf32>,
    return
  }
  func.func @transform_0(%arg0: i32) -> (i32, i32, i32) {
    %c0_i32 = arith.constant 0 : i32
    %c0_i32_0 = arith.constant 0 : i32
    %c0_i32_1 = arith.constant 0 : i32
    return %arg0, %c0_i32, %c0_i32_0 : i32, i32, i32
  }
  func.func @transform_1(%arg0: i32) -> (i32, i32) {
    %c0_i32 = arith.constant 0 : i32
    %c0_i32_0 = arith.constant 0 : i32
    %c0_i32_1 = arith.constant 0 : i32
    return %c0_i32, %c0_i32_0 : i32, i32
  }
  func.func @transform_2(%arg0: i32) -> (i32, i32) {
    %c0_i32 = arith.constant 0 : i32
    %c0_i32_0 = arith.constant 0 : i32
    %c0_i32_1 = arith.constant 0 : i32
    return %c0_i32, %c0_i32_0 : i32, i32
  }
  func.func @transform_3(%arg0: i32) -> (i32, i32) {
    %c0_i32 = arith.constant 0 : i32
    %c0_i32_0 = arith.constant 0 : i32
    %c0_i32_1 = arith.constant 0 : i32
    return %c0_i32, %c0_i32_0 : i32, i32
  }
  func.func @transform_4(%arg0: i32) -> (i32, i32) {
    %c0_i32 = arith.constant 0 : i32
    %c0_i32_0 = arith.constant 0 : i32
    %c0_i32_1 = arith.constant 0 : i32
    return %c0_i32, %c0_i32_0 : i32, i32
  }
  func.func @transform_5(%arg0: i32) -> i32 {
    %c0_i32 = arith.constant 0 : i32
    %c0_i32_0 = arith.constant 0 : i32
    return %c0_i32 : i32
  }
  func.func @transform_6(%arg0: i32) -> (i32, i32, i32) {
    %c0_i32 = arith.constant 0 : i32
    %c0_i32_0 = arith.constant 0 : i32
    %c0_i32_1 = arith.constant 0 : i32
    return %arg0, %c0_i32, %c0_i32_0 : i32, i32, i32
  }
}

</mosaic_0001>

<llo_original>
// kernel: channel_attention.1
$region0: #{channel_attention.1}
  #allocation0 [shape = 'u32[]', space=smem, size = 0x4, offset = 0x4, fixed_abs, tag = 'smem constant byte address 0x4 - core index']
  #allocation1 [shape = 'u32[72,128]{1,0:T(1,128)}', space=vmem, size = 0x9000, scoped, tag = 'internal scratch']
  #allocation2 [shape = 'f32[1]{0:T(128)S(6)}', space=smem, size = 0x200, scoped, tag = 'scoped memory for channel_attention.1']
  %s0 = inlined_call_operand.vmem [shape: f32[2,32,256], index: 0, kind: input, shape index: {}]
  %s1 = inlined_call_operand.vmem [shape: f32[256,8], index: 1, kind: input, shape index: {}]
  %s2 = inlined_call_operand.vmem [shape: f32[128,32], index: 2, kind: input, shape index: {}]
  %s3 = inlined_call_operand.vmem [shape: f32[32,128], index: 3, kind: input, shape index: {}]
  %s4 = inlined_call_operand.vmem [shape: f32[1,8], index: 4, kind: input, shape index: {}]
  %s5 = inlined_call_operand.<no memory space> [shape: f32[1], index: 5, kind: input, shape index: {}]
  %s6 = inlined_call_operand.vmem [shape: f32[2,32,1], index: 6, kind: output, shape index: {}]
  %s7 = sld [smem:[#allocation0]]
  $region57: #{channel_attention.1} parent=0
    _
  %s9 = ssub.s32 1, %s7
  %s10 = scalar_select 0, %s9, %s7
  %11 = sst [smem:[#allocation2]] %s5
  loop: start=0, step=1, limit=4
  $region2: #{channel_attention.1} parent=0 // loop_pre_header
    _
  $region3: #{channel_attention.1} parent=0 // loop_header
    %s13 = sphi 0, %s17
    %p14 = scmp.ge.s32.totalorder %s13, 4
    %s23 = sphi 0, %s25
    %s26 = sphi 0, %s23
    %s27 = sphi 0, %s26
    %s43 = sphi 0, %s27
    %s47 = sphi 0, %s47
    %s49 = sphi 0, %s47
    %s50 = sphi 0, %s49
    %s64 = sphi 0, %s50
    %s68 = sphi 0, %s68
    %s70 = sphi 0, %s68
    %s71 = sphi 0, %s70
    %s85 = sphi 0, %s71
    %s89 = sphi 0, %s89
    %s91 = sphi 0, %s89
    %s92 = sphi 0, %s91
    %s106 = sphi 0, %s92
    %s110 = sphi 0, %s110
    %s112 = sphi 0, %s110
    %s113 = sphi 0, %s112
    %s127 = sphi 0, %s113
    %s131 = sphi 0, %s131
    %s133 = sphi 0, %s131
    %s134 = sphi 0, %s133
    %s148 = sphi 0, %s134
    %s154 = sphi 0, %s156
    %s157 = sphi 0, %s154
    %s158 = sphi 0, %s157
    %s174 = sphi 0, %s158
  $region4: #{channel_attention.1} parent=0 // loop_header_branch
    %16 = sbr.rel (%p14) target = $region8
  $region5: #{channel_attention.1} parent=0 // loop_body
    %s18 = ssub.s32 %s13, 1
    %s19 = ssub.s32 %s13, 2
    %s20 = sadd.s32 %s13, 1
    %s21 = ssub.s32 %s13, %s20
    %p22 = scmp.eq.s32.totalorder %s21, 0
    %s24 = sadd.s32 %s23, 1
    %s25 = scalar_select %p22, %s23, %s24
    %p28 = pneg %p22
    %p29 = scmp.eq.s32.totalorder %s13, 1
    %p30 = por %p28, %p29
    %p31 = scmp.ne.s32.totalorder %s23, %s26
    %p32 = scmp.eq.s32.totalorder %s13, 0
    %p33 = por %p31, %p32
    %p34 = scmp.ne.s32.totalorder %s23, %s26
    %p35 = scmp.eq.s32.totalorder %s18, 1
    %p36 = por %p34, %p35
    %p37 = scmp.ne.s32.totalorder %s26, %s27
    %p38 = scmp.eq.s32.totalorder %s18, 0
    %p39 = por %p37, %p38
    %p40 = scmp.ne.s32.totalorder %s26, %s27
    %p41 = scmp.eq.s32.totalorder %s19, 1
    %p42 = por %p40, %p41
    %p44 = scmp.ne.s32.totalorder %s27, %s43
    %p45 = scmp.eq.s32.totalorder %s19, 0
    %p46 = por %p44, %p45
    %s48 = sadd.s32 %s47, 1
    %p51 = scmp.eq.s32.totalorder %s13, 1
    %p52 = scmp.ne.s32.totalorder %s47, %s49
    %p53 = scmp.eq.s32.totalorder %s13, 0
    %p54 = por %p52, %p53
    %p55 = scmp.ne.s32.totalorder %s47, %s49
    %p56 = scmp.eq.s32.totalorder %s18, 1
    %p57 = por %p55, %p56
    %p58 = scmp.ne.s32.totalorder %s49, %s50
    %p59 = scmp.eq.s32.totalorder %s18, 0
    %p60 = por %p58, %p59
    %p61 = scmp.ne.s32.totalorder %s49, %s50
    %p62 = scmp.eq.s32.totalorder %s19, 1
    %p63 = por %p61, %p62
    %p65 = scmp.ne.s32.totalorder %s50, %s64
    %p66 = scmp.eq.s32.totalorder %s19, 0
    %p67 = por %p65, %p66
    %s69 = sadd.s32 %s68, 1
    %p72 = scmp.eq.s32.totalorder %s13, 1
    %p73 = scmp.ne.s32.totalorder %s68, %s70
    %p74 = scmp.eq.s32.totalorder %s13, 0
    %p75 = por %p73, %p74
    %p76 = scmp.ne.s32.totalorder %s68, %s70
    %p77 = scmp.eq.s32.totalorder %s18, 1
    %p78 = por %p76, %p77
    %p79 = scmp.ne.s32.totalorder %s70, %s71
    %p80 = scmp.eq.s32.totalorder %s18, 0
    %p81 = por %p79, %p80
    %p82 = scmp.ne.s32.totalorder %s70, %s71
    %p83 = scmp.eq.s32.totalorder %s19, 1
    %p84 = por %p82, %p83
    %p86 = scmp.ne.s32.totalorder %s71, %s85
    %p87 = scmp.eq.s32.totalorder %s19, 0
    %p88 = por %p86, %p87
    %s90 = sadd.s32 %s89, 1
    %p93 = scmp.eq.s32.totalorder %s13, 1
    %p94 = scmp.ne.s32.totalorder %s89, %s91
    %p95 = scmp.eq.s32.totalorder %s13, 0
    %p96 = por %p94, %p95
    %p97 = scmp.ne.s32.totalorder %s89, %s91
    %p98 = scmp.eq.s32.totalorder %s18, 1
    %p99 = por %p97, %p98
    %p100 = scmp.ne.s32.totalorder %s91, %s92
    %p101 = scmp.eq.s32.totalorder %s18, 0
    %p102 = por %p100, %p101
    %p103 = scmp.ne.s32.totalorder %s91, %s92
    %p104 = scmp.eq.s32.totalorder %s19, 1
    %p105 = por %p103, %p104
    %p107 = scmp.ne.s32.totalorder %s92, %s106
    %p108 = scmp.eq.s32.totalorder %s19, 0
    %p109 = por %p107, %p108
    %s111 = sadd.s32 %s110, 1
    %p114 = scmp.eq.s32.totalorder %s13, 1
    %p115 = scmp.ne.s32.totalorder %s110, %s112
    %p116 = scmp.eq.s32.totalorder %s13, 0
    %p117 = por %p115, %p116
    %p118 = scmp.ne.s32.totalorder %s110, %s112
    %p119 = scmp.eq.s32.totalorder %s18, 1
    %p120 = por %p118, %p119
    %p121 = scmp.ne.s32.totalorder %s112, %s113
    %p122 = scmp.eq.s32.totalorder %s18, 0
    %p123 = por %p121, %p122
    %p124 = scmp.ne.s32.totalorder %s112, %s113
    %p125 = scmp.eq.s32.totalorder %s19, 1
    %p126 = por %p124, %p125
    %p128 = scmp.ne.s32.totalorder %s113, %s127
    %p129 = scmp.eq.s32.totalorder %s19, 0
    %p130 = por %p128, %p129
    %s132 = sadd.s32 %s131, 1
    %p135 = scmp.eq.s32.totalorder %s13, 1
    %p136 = scmp.ne.s32.totalorder %s131, %s133
    %p137 = scmp.eq.s32.totalorder %s13, 0
    %p138 = por %p136, %p137
    %p139 = scmp.ne.s32.totalorder %s131, %s133
    %p140 = scmp.eq.s32.totalorder %s18, 1
    %p141 = por %p139, %p140
    %p142 = scmp.ne.s32.totalorder %s133, %s134
    %p143 = scmp.eq.s32.totalorder %s18, 0
    %p144 = por %p142, %p143
    %p145 = scmp.ne.s32.totalorder %s133, %s134
    %p146 = scmp.eq.s32.totalorder %s19, 1
    %p147 = por %p145, %p146
    %p149 = scmp.ne.s32.totalorder %s134, %s148
    %p150 = scmp.eq.s32.totalorder %s19, 0
    %p151 = por %p149, %p150
    %s152 = ssub.s32 %s13, %s20
    %p153 = scmp.eq.s32.totalorder %s152, 0
    %s155 = sadd.s32 %s154, 1
    %s156 = scalar_select %p153, %s154, %s155
    %p159 = pneg %p153
    %p160 = scmp.eq.s32.totalorder %s13, 1
    %p161 = por %p159, %p160
    %p162 = scmp.ne.s32.totalorder %s154, %s157
    %p163 = scmp.eq.s32.totalorder %s13, 0
    %p164 = por %p162, %p163
    %p165 = scmp.ne.s32.totalorder %s154, %s157
    %p166 = scmp.eq.s32.totalorder %s18, 1
    %p167 = por %p165, %p166
    %p168 = scmp.ne.s32.totalorder %s157, %s158
    %p169 = scmp.eq.s32.totalorder %s18, 0
    %p170 = por %p168, %p169
    %p171 = scmp.ne.s32.totalorder %s157, %s158
    %p172 = scmp.eq.s32.totalorder %s19, 1
    %p173 = por %p171, %p172
    %p175 = scmp.ne.s32.totalorder %s158, %s174
    %p176 = scmp.eq.s32.totalorder %s19, 0
    %p177 = por %p175, %p176
    %p178 = scmp.le.s32.totalorder 1, %s13
    %p179 = scmp.lt.s32.totalorder %s13, 3
    %p180 = pnand %p178, %p179
    %p181 = pneg %p180
    // Predicated region
    $region9: #{channel_attention.1} parent=5 // pred_check
      _
    $region10: #{channel_attention.1} parent=5 // pred_check_branch
      %183 = sbr.rel (%p180) target = $region12
    $region11: #{channel_attention.1} parent=5 // pred_region
      %s184 = ssub.s32 %s13, 1
      // Predicated region
      $region13: #{channel_attention.1} parent=11 // pred_check
        %p185 = pneg %p60
      $region14: #{channel_attention.1} parent=11 // pred_check_branch
        %187 = sbr.rel (%p185) target = $region16
      $region15: #{channel_attention.1} parent=11 // pred_region
        _
      $region16: #{channel_attention.1} parent=11 // pred_fallthru
        _
      // Predicated region
      $region17: #{channel_attention.1} parent=11 // pred_check
        %p188 = pneg %p81
      $region18: #{channel_attention.1} parent=11 // pred_check_branch
        %190 = sbr.rel (%p188) target = $region20
      $region19: #{channel_attention.1} parent=11 // pred_region
        _
      $region20: #{channel_attention.1} parent=11 // pred_fallthru
        _
      // Predicated region
      $region21: #{channel_attention.1} parent=11 // pred_check
        %p191 = pneg %p102
      $region22: #{channel_attention.1} parent=11 // pred_check_branch
        %193 = sbr.rel (%p191) target = $region24
      $region23: #{channel_attention.1} parent=11 // pred_region
        _
      $region24: #{channel_attention.1} parent=11 // pred_fallthru
        _
      // Predicated region
      $region25: #{channel_attention.1} parent=11 // pred_check
        %p194 = pneg %p123
      $region26: #{channel_attention.1} parent=11 // pred_check_branch
        %196 = sbr.rel (%p194) target = $region28
      $region27: #{channel_attention.1} parent=11 // pred_region
        _
      $region28: #{channel_attention.1} parent=11 // pred_fallthru
        _
      // Predicated region
      $region29: #{channel_attention.1} parent=11 // pred_check
        %p197 = pneg %p144
      $region30: #{channel_attention.1} parent=11 // pred_check_branch
        %199 = sbr.rel (%p197) target = $region32
      $region31: #{channel_attention.1} parent=11 // pred_region
        _
      $region32: #{channel_attention.1} parent=11 // pred_fallthru
        _
    $region12: #{channel_attention.1} parent=5 // pred_fallthru
      _
    %p200 = scmp.lt.s32.totalorder %s13, 2
    // Predicated region
    $region33: #{channel_attention.1} parent=5 // pred_check
      %p201 = pneg %p200
    $region34: #{channel_attention.1} parent=5 // pred_check_branch
      %203 = sbr.rel (%p201) target = $region36
    $region35: #{channel_attention.1} parent=5 // pred_region
      // Predicated region
      $region37: #{channel_attention.1} parent=35 // pred_check
        %p204 = pneg %p33
      $region38: #{channel_attention.1} parent=35 // pred_check_branch
        %206 = sbr.rel (%p204) target = $region40
      $region39: #{channel_attention.1} parent=35 // pred_region
        %p207 = scmp.lt.s32.totalorder %s13, 1
        %s208 = scalar_select %p207, %s13, 1
        %s209 = smul.addr %s208, 8
        %s210 = smul.addr %s209, 8
        %s211 = scalar_lea.vmem %s0, %s210
      $region40: #{channel_attention.1} parent=35 // pred_fallthru
        _
    $region36: #{channel_attention.1} parent=5 // pred_fallthru
      _
    %p212 = scmp.le.s32.totalorder 1, %s13
    %p213 = scmp.lt.s32.totalorder %s13, 3
    %p214 = pnand %p212, %p213
    %p215 = pneg %p214
    // Predicated region
    $region41: #{channel_attention.1} parent=5 // pred_check
      _
    $region42: #{channel_attention.1} parent=5 // pred_check_branch
      %217 = sbr.rel (%p214) target = $region44
    $region43: #{channel_attention.1} parent=5 // pred_region
      %s218 = ssub.s32 %s13, 1
      %p219 = scmp.lt.s32.totalorder %s18, 1
      %s220 = scalar_select %p219, %s18, 1
      %s221 = smul.addr %s220, 8
      %s222 = smul.addr %s221, 8
      %s223 = scalar_lea.vmem %s0, %s222
      %p224 = pneg %p39
      %p225 = pneg %p36
      %p226 = pneg %p60
      %p227 = pneg %p57
      %p228 = pneg %p81
      %p229 = pneg %p78
      %p230 = pneg %p102
      %p231 = pneg %p99
      %p232 = pneg %p123
      %p233 = pneg %p120
      %p234 = pneg %p144
      %p235 = pneg %p141
      %p236 = pneg %p170
      %p237 = pneg %p167
      %p238 = scmp.lt.s32.totalorder %s18, 1
      %s239 = scalar_select %p238, %s18, 1
      %s240 = smul.addr %s239, 4
      %s241 = smul.addr %s240, 8
      %s242 = scalar_lea.vmem %s6, %s241
      %p243 = scmp.lt.s32.totalorder %s18, 1
      %s244 = scalar_select %p243, %s18, 1
      %s245 = smul.addr %s244, 8
      %s246 = smul.addr %s245, 8
      %s247 = scalar_lea.vmem %s0, %s246
      %p248 = scmp.lt.s32.totalorder %s18, 1
      %s249 = scalar_select %p248, %s18, 1
      %s250 = smul.addr %s249, 4
      %s251 = smul.addr %s250, 8
      %s252 = scalar_lea.vmem %s6, %s251
      %v253 = vld [vmem:[%s247] sm:$0xff]
      %v254 = vld [vmem:[%s247 + $0x8] sm:$0xff]
      %v255 = vld [vmem:[%s247 + $0x10] sm:$0xff]
      %v256 = vld [vmem:[%s247 + $0x18] sm:$0xff]
      %v257 = vld [vmem:[%s247 + $0x20] sm:$0xff]
      %v258 = vld [vmem:[%s247 + $0x28] sm:$0xff]
      %v259 = vld [vmem:[%s247 + $0x30] sm:$0xff]
      %v260 = vld [vmem:[%s247 + $0x38] sm:$0xff]
      %v261 = vld [vmem:[%s1] sm:$0xff]
      %v262 = vld [vmem:[%s1 + $0x8] sm:$0xff]
      %v263 = vld [vmem:[%s1 + $0x10] sm:$0xff]
      %v264 = vld [vmem:[%s1 + $0x18] sm:$0xff]
      %v265 = vld [vmem:[%s1 + $0x20] sm:$0xff]
      %v266 = vld [vmem:[%s1 + $0x28] sm:$0xff]
      %v267 = vld [vmem:[%s1 + $0x30] sm:$0xff]
      %v268 = vld [vmem:[%s1 + $0x38] sm:$0xff]
      %v269 = vld [vmem:[%s1 + $0x40] sm:$0xff]
      %v270 = vld [vmem:[%s1 + $0x48] sm:$0xff]
      %v271 = vld [vmem:[%s1 + $0x50] sm:$0xff]
      %v272 = vld [vmem:[%s1 + $0x58] sm:$0xff]
      %v273 = vld [vmem:[%s1 + $0x60] sm:$0xff]
      %v274 = vld [vmem:[%s1 + $0x68] sm:$0xff]
      %v275 = vld [vmem:[%s1 + $0x70] sm:$0xff]
      %v276 = vld [vmem:[%s1 + $0x78] sm:$0xff]
      %v277 = vld [vmem:[%s1 + $0x80] sm:$0xff]
      %v278 = vld [vmem:[%s1 + $0x88] sm:$0xff]
      %v279 = vld [vmem:[%s1 + $0x90] sm:$0xff]
      %v280 = vld [vmem:[%s1 + $0x98] sm:$0xff]
      %v281 = vld [vmem:[%s1 + $0xa0] sm:$0xff]
      %v282 = vld [vmem:[%s1 + $0xa8] sm:$0xff]
      %v283 = vld [vmem:[%s1 + $0xb0] sm:$0xff]
      %v284 = vld [vmem:[%s1 + $0xb8] sm:$0xff]
      %v285 = vld [vmem:[%s1 + $0xc0] sm:$0xff]
      %v286 = vld [vmem:[%s1 + $0xc8] sm:$0xff]
      %v287 = vld [vmem:[%s1 + $0xd0] sm:$0xff]
      %v288 = vld [vmem:[%s1 + $0xd8] sm:$0xff]
      %v289 = vld [vmem:[%s1 + $0xe0] sm:$0xff]
      %v290 = vld [vmem:[%s1 + $0xe8] sm:$0xff]
      %v291 = vld [vmem:[%s1 + $0xf0] sm:$0xff]
      %v292 = vld [vmem:[%s1 + $0xf8] sm:$0xff]
      %293 = vmatpush.msra.mxu0 %v276
      %294 = vmatpush.msra.mxu0 %v275
      %295 = vmatpush.msra.mxu0 %v274
      %296 = vmatpush.msra.mxu0 %v273
      %297 = vmatpush.msra.mxu0 %v272
      %298 = vmatpush.msra.mxu0 %v271
      %299 = vmatpush.msra.mxu0 %v270
      %300 = vmatpush.msra.mxu0 %v269
      %301 = vmatpush.msra.mxu0 %v268
      %302 = vmatpush.msra.mxu0 %v267
      %303 = vmatpush.msra.mxu0 %v266
      %304 = vmatpush.msra.mxu0 %v265
      %305 = vmatpush.msra.mxu0 %v264
      %306 = vmatpush.msra.mxu0 %v263
      %307 = vmatpush.msra.mxu0 %v262
      %308 = vmatpush.msra.mxu0 %v261
      %309 = vmatmul.f32.gmra.mxu0 %v253
      %v310 = vpop.f32.mrf.mxu0
      %v311 = vadd.f32 0.0, %v310
      %312 = vmatmul.f32.gmra.mxu0 %v255
      %v313 = vpop.f32.mrf.mxu0
      %v314 = vadd.f32 0.0, %v313
      %315 = vmatmul.f32.gmra.mxu0 %v257
      %v316 = vpop.f32.mrf.mxu0
      %v317 = vadd.f32 0.0, %v316
      %318 = vmatmul.f32.gmra.mxu0 %v259
      %v319 = vpop.f32.mrf.mxu0
      %v320 = vadd.f32 0.0, %v319
      %321 = vdwg.mxu0
      %322 = vmatpush.msra.mxu0 %v292
      %323 = vmatpush.msra.mxu0 %v291
      %324 = vmatpush.msra.mxu0 %v290
      %325 = vmatpush.msra.mxu0 %v289
      %326 = vmatpush.msra.mxu0 %v288
      %327 = vmatpush.msra.mxu0 %v287
      %328 = vmatpush.msra.mxu0 %v286
      %329 = vmatpush.msra.mxu0 %v285
      %330 = vmatpush.msra.mxu0 %v284
      %331 = vmatpush.msra.mxu0 %v283
      %332 = vmatpush.msra.mxu0 %v282
      %333 = vmatpush.msra.mxu0 %v281
      %334 = vmatpush.msra.mxu0 %v280
      %335 = vmatpush.msra.mxu0 %v279
      %336 = vmatpush.msra.mxu0 %v278
      %337 = vmatpush.msra.mxu0 %v277
      %338 = vmatmul.f32.gmra.mxu0 %v254
      %v339 = vpop.f32.mrf.mxu0
      %v340 = vadd.f32 %v311, %v339
      %341 = vmatmul.f32.gmra.mxu0 %v256
      %v342 = vpop.f32.mrf.mxu0
      %v343 = vadd.f32 %v314, %v342
      %344 = vmatmul.f32.gmra.mxu0 %v258
      %v345 = vpop.f32.mrf.mxu0
      %v346 = vadd.f32 %v317, %v345
      %347 = vmatmul.f32.gmra.mxu0 %v260
      %v348 = vpop.f32.mrf.mxu0
      %v349 = vadd.f32 %v320, %v348
      %350 = vdwg.mxu0
      %v351 = vld [vmem:[%s2] sm:$0xff]
      %v352 = vld [vmem:[%s2 + $0x8] sm:$0xff]
      %v353 = vld [vmem:[%s2 + $0x10] sm:$0xff]
      %v354 = vld [vmem:[%s2 + $0x18] sm:$0xff]
      %v355 = vld [vmem:[%s2 + $0x20] sm:$0xff]
      %v356 = vld [vmem:[%s2 + $0x28] sm:$0xff]
      %v357 = vld [vmem:[%s2 + $0x30] sm:$0xff]
      %v358 = vld [vmem:[%s2 + $0x38] sm:$0xff]
      %v359 = vld [vmem:[%s2 + $0x40] sm:$0xff]
      %v360 = vld [vmem:[%s2 + $0x48] sm:$0xff]
      %v361 = vld [vmem:[%s2 + $0x50] sm:$0xff]
      %v362 = vld [vmem:[%s2 + $0x58] sm:$0xff]
      %v363 = vld [vmem:[%s2 + $0x60] sm:$0xff]
      %v364 = vld [vmem:[%s2 + $0x68] sm:$0xff]
      %v365 = vld [vmem:[%s2 + $0x70] sm:$0xff]
      %v366 = vld [vmem:[%s2 + $0x78] sm:$0xff]
      %vm367 = vcmask 261120
      %v369 = vsel %vm367, %v351, 0
      %v372 = vsel %vm367, %v352, 0
      %v375 = vsel %vm367, %v353, 0
      %v378 = vsel %vm367, %v354, 0
      %v381 = vsel %vm367, %v355, 0
      %v384 = vsel %vm367, %v356, 0
      %v387 = vsel %vm367, %v357, 0
      %v390 = vsel %vm367, %v358, 0
      %v393 = vsel %vm367, %v359, 0
      %v396 = vsel %vm367, %v360, 0
      %v399 = vsel %vm367, %v361, 0
      %v402 = vsel %vm367, %v362, 0
      %v405 = vsel %vm367, %v363, 0
      %v408 = vsel %vm367, %v364, 0
      %v411 = vsel %vm367, %v365, 0
      %v414 = vsel %vm367, %v366, 0
      %416 = vmatpush.msra.mxu0 0.0
      %417 = vmatpush.msra.mxu0 0.0
      %418 = vmatpush.msra.mxu0 0.0
      %419 = vmatpush.msra.mxu0 0.0
      %420 = vmatpush.msra.mxu0 0.0
      %421 = vmatpush.msra.mxu0 0.0
      %422 = vmatpush.msra.mxu0 0.0
      %423 = vmatpush.msra.mxu0 0.0
      %424 = vmatpush.msra.mxu0 0.0
      %425 = vmatpush.msra.mxu0 0.0
      %426 = vmatpush.msra.mxu0 0.0
      %427 = vmatpush.msra.mxu0 0.0
      %428 = vmatpush.msra.mxu0 %v349
      %429 = vmatpush.msra.mxu0 %v346
      %430 = vmatpush.msra.mxu0 %v343
      %431 = vmatpush.msra.mxu0 %v340
      %432 = vmatmul.f32.gmra.mxu0 %v369
      %v433 = vpop.f32.mrf.mxu0
      %v434 = vadd.f32 0.0, %v433
      %435 = vmatmul.f32.gmra.mxu0 %v372
      %v436 = vpop.f32.mrf.mxu0
      %v437 = vadd.f32 0.0, %v436
      %438 = vmatmul.f32.gmra.mxu0 %v375
      %v439 = vpop.f32.mrf.mxu0
      %v440 = vadd.f32 0.0, %v439
      %441 = vmatmul.f32.gmra.mxu0 %v378
      %v442 = vpop.f32.mrf.mxu0
      %v443 = vadd.f32 0.0, %v442
      %444 = vmatmul.f32.gmra.mxu0 %v381
      %v445 = vpop.f32.mrf.mxu0
      %v446 = vadd.f32 0.0, %v445
      %447 = vmatmul.f32.gmra.mxu0 %v384
      %v448 = vpop.f32.mrf.mxu0
      %v449 = vadd.f32 0.0, %v448
      %450 = vmatmul.f32.gmra.mxu0 %v387
      %v451 = vpop.f32.mrf.mxu0
      %v452 = vadd.f32 0.0, %v451
      %453 = vmatmul.f32.gmra.mxu0 %v390
      %v454 = vpop.f32.mrf.mxu0
      %v455 = vadd.f32 0.0, %v454
      %456 = vmatmul.f32.gmra.mxu0 %v393
      %v457 = vpop.f32.mrf.mxu0
      %v458 = vadd.f32 0.0, %v457
      %459 = vmatmul.f32.gmra.mxu0 %v396
      %v460 = vpop.f32.mrf.mxu0
      %v461 = vadd.f32 0.0, %v460
      %462 = vmatmul.f32.gmra.mxu0 %v399
      %v463 = vpop.f32.mrf.mxu0
      %v464 = vadd.f32 0.0, %v463
      %465 = vmatmul.f32.gmra.mxu0 %v402
      %v466 = vpop.f32.mrf.mxu0
      %v467 = vadd.f32 0.0, %v466
      %468 = vmatmul.f32.gmra.mxu0 %v405
      %v469 = vpop.f32.mrf.mxu0
      %v470 = vadd.f32 0.0, %v469
      %471 = vmatmul.f32.gmra.mxu0 %v408
      %v472 = vpop.f32.mrf.mxu0
      %v473 = vadd.f32 0.0, %v472
      %474 = vmatmul.f32.gmra.mxu0 %v411
      %v475 = vpop.f32.mrf.mxu0
      %v476 = vadd.f32 0.0, %v475
      %477 = vmatmul.f32.gmra.mxu0 %v414
      %v478 = vpop.f32.mrf.mxu0
      %v479 = vadd.f32 0.0, %v478
      %480 = vdwg.mxu0
      %v481 = vmax.f32 %v434, 0.0
      %v482 = vmax.f32 %v437, 0.0
      %v483 = vmax.f32 %v440, 0.0
      %v484 = vmax.f32 %v443, 0.0
      %v485 = vmax.f32 %v446, 0.0
      %v486 = vmax.f32 %v449, 0.0
      %v487 = vmax.f32 %v452, 0.0
      %v488 = vmax.f32 %v455, 0.0
      %v489 = vmax.f32 %v458, 0.0
      %v490 = vmax.f32 %v461, 0.0
      %v491 = vmax.f32 %v464, 0.0
      %v492 = vmax.f32 %v467, 0.0
      %v493 = vmax.f32 %v470, 0.0
      %v494 = vmax.f32 %v473, 0.0
      %v495 = vmax.f32 %v476, 0.0
      %v496 = vmax.f32 %v479, 0.0
      %v497 = vld [vmem:[%s4] sm:$0x1]
      %v499 = vperm.slane %v497, 0
      %v501 = vmul.f32 %v481, %v499
      %v502 = vmul.f32 %v482, %v499
      %v503 = vmul.f32 %v483, %v499
      %v504 = vmul.f32 %v484, %v499
      %v505 = vmul.f32 %v485, %v499
      %v506 = vmul.f32 %v486, %v499
      %v507 = vmul.f32 %v487, %v499
      %v508 = vmul.f32 %v488, %v499
      %v509 = vmul.f32 %v489, %v499
      %v510 = vmul.f32 %v490, %v499
      %v511 = vmul.f32 %v491, %v499
      %v512 = vmul.f32 %v492, %v499
      %v513 = vmul.f32 %v493, %v499
      %v514 = vmul.f32 %v494, %v499
      %v515 = vmul.f32 %v495, %v499
      %v516 = vmul.f32 %v496, %v499
      %vm517 = vcmask 64512
      %v518 = vsel %vm517, %v501, 0.0
      %519 = vadd.xlane.f32.xlu0 %v518
      %v520 = vpop.xlane.xlu0 %519
      %v521 = vsel %vm517, %v502, 0.0
      %522 = vadd.xlane.f32.xlu0 %v521
      %v523 = vpop.xlane.xlu0 %522
      %v524 = vsel %vm517, %v503, 0.0
      %525 = vadd.xlane.f32.xlu0 %v524
      %v526 = vpop.xlane.xlu0 %525
      %v527 = vsel %vm517, %v504, 0.0
      %528 = vadd.xlane.f32.xlu0 %v527
      %v529 = vpop.xlane.xlu0 %528
      %v530 = vsel %vm517, %v505, 0.0
      %531 = vadd.xlane.f32.xlu0 %v530
      %v532 = vpop.xlane.xlu0 %531
      %v533 = vsel %vm517, %v506, 0.0
      %534 = vadd.xlane.f32.xlu0 %v533
      %v535 = vpop.xlane.xlu0 %534
      %v536 = vsel %vm517, %v507, 0.0
      %537 = vadd.xlane.f32.xlu0 %v536
      %v538 = vpop.xlane.xlu0 %537
      %v539 = vsel %vm517, %v508, 0.0
      %540 = vadd.xlane.f32.xlu0 %v539
      %v541 = vpop.xlane.xlu0 %540
      %v542 = vsel %vm517, %v509, 0.0
      %543 = vadd.xlane.f32.xlu0 %v542
      %v544 = vpop.xlane.xlu0 %543
      %v545 = vsel %vm517, %v510, 0.0
      %546 = vadd.xlane.f32.xlu0 %v545
      %v547 = vpop.xlane.xlu0 %546
      %v548 = vsel %vm517, %v511, 0.0
      %549 = vadd.xlane.f32.xlu0 %v548
      %v550 = vpop.xlane.xlu0 %549
      %v551 = vsel %vm517, %v512, 0.0
      %552 = vadd.xlane.f32.xlu0 %v551
      %v553 = vpop.xlane.xlu0 %552
      %v554 = vsel %vm517, %v513, 0.0
      %555 = vadd.xlane.f32.xlu0 %v554
      %v556 = vpop.xlane.xlu0 %555
      %v557 = vsel %vm517, %v514, 0.0
      %558 = vadd.xlane.f32.xlu0 %v557
      %v559 = vpop.xlane.xlu0 %558
      %v560 = vsel %vm517, %v515, 0.0
      %561 = vadd.xlane.f32.xlu0 %v560
      %v562 = vpop.xlane.xlu0 %561
      %v563 = vsel %vm517, %v516, 0.0
      %564 = vadd.xlane.f32.xlu0 %v563
      %v565 = vpop.xlane.xlu0 %564
      %v566 = vld [vmem:[%s3] sm:$0xff]
      %v567 = vld [vmem:[%s3 + $0x8] sm:$0xff]
      %v568 = vld [vmem:[%s3 + $0x10] sm:$0xff]
      %v569 = vld [vmem:[%s3 + $0x18] sm:$0xff]
      %s570 = sld [smem:[#allocation2]]
      %v571 = vstv %s570
      %572 = vmatpush.msra.mxu0 %v565
      %573 = vmatpush.msra.mxu0 %v562
      %574 = vmatpush.msra.mxu0 %v559
      %575 = vmatpush.msra.mxu0 %v556
      %576 = vmatpush.msra.mxu0 %v553
      %577 = vmatpush.msra.mxu0 %v550
      %578 = vmatpush.msra.mxu0 %v547
      %579 = vmatpush.msra.mxu0 %v544
      %580 = vmatpush.msra.mxu0 %v541
      %581 = vmatpush.msra.mxu0 %v538
      %582 = vmatpush.msra.mxu0 %v535
      %583 = vmatpush.msra.mxu0 %v532
      %584 = vmatpush.msra.mxu0 %v529
      %585 = vmatpush.msra.mxu0 %v526
      %586 = vmatpush.msra.mxu0 %v523
      %587 = vmatpush.msra.mxu0 %v520
      %588 = vmatmul.f32.gmra.mxu0 %v566
      %v589 = vpop.f32.mrf.mxu0
      %v590 = vadd.f32 %v571, %v589
      %591 = vmatmul.f32.gmra.mxu0 %v567
      %v592 = vpop.f32.mrf.mxu0
      %v593 = vadd.f32 %v571, %v592
      %594 = vmatmul.f32.gmra.mxu0 %v568
      %v595 = vpop.f32.mrf.mxu0
      %v596 = vadd.f32 %v571, %v595
      %597 = vmatmul.f32.gmra.mxu0 %v569
      %v598 = vpop.f32.mrf.mxu0
      %v599 = vadd.f32 %v571, %v598
      %600 = vdwg.mxu0
      %v601 = vsub.f32 0.0, %v590
      %v602 = vsub.f32 0.0, %v593
      %v603 = vsub.f32 0.0, %v596
      %v604 = vsub.f32 0.0, %v599
      %v605 = vmul.f32 %v601, 1.442695
      %v606 = vpow.pop %v605
      %v607 = vmul.f32 %v602, 1.442695
      %v608 = vpow.pop %v607
      %v609 = vmul.f32 %v603, 1.442695
      %v610 = vpow.pop %v609
      %v611 = vmul.f32 %v604, 1.442695
      %v612 = vpow.pop %v611
      %v613 = vadd.f32 %v606, 1.0
      %v614 = vadd.f32 %v608, 1.0
      %v615 = vadd.f32 %v610, 1.0
      %v616 = vadd.f32 %v612, 1.0
      %v617 = vrcp.pop %v613
      %v618 = vmul.f32 %v613, %v617
      %v619 = vsub.f32 1.0, %v618
      %v620 = vmul.f32 %v617, %v619
      %v621 = vadd.f32 %v617, %v620
      %vm622 = vweird.f32 %v613
      %vm623 = vweird.f32 %v617
      %vm624 = vmor %vm622, %vm623
      %v625 = vsel %vm624, %v617, %v621
      %v626 = vand.u32 2147483647, %v613
      %vm627 = vcmp.eq.f32.partialorder %v626, 8.507059e+37
      %v628 = vand.u32 %v613, 2147483648
      %v629 = vor.u32 1.1754944e-38, %v628
      %v630 = vsel %vm627, %v629, %v625
      %v631 = vmul.f32 1.0, %v630
      %v632 = vrcp.pop %v614
      %v633 = vmul.f32 %v614, %v632
      %v634 = vsub.f32 1.0, %v633
      %v635 = vmul.f32 %v632, %v634
      %v636 = vadd.f32 %v632, %v635
      %vm637 = vweird.f32 %v614
      %vm638 = vweird.f32 %v632
      %vm639 = vmor %vm637, %vm638
      %v640 = vsel %vm639, %v632, %v636
      %v641 = vand.u32 2147483647, %v614
      %vm642 = vcmp.eq.f32.partialorder %v641, 8.507059e+37
      %v643 = vand.u32 %v614, 2147483648
      %v644 = vor.u32 1.1754944e-38, %v643
      %v645 = vsel %vm642, %v644, %v640
      %v646 = vmul.f32 1.0, %v645
      %v647 = vrcp.pop %v615
      %v648 = vmul.f32 %v615, %v647
      %v649 = vsub.f32 1.0, %v648
      %v650 = vmul.f32 %v647, %v649
      %v651 = vadd.f32 %v647, %v650
      %vm652 = vweird.f32 %v615
      %vm653 = vweird.f32 %v647
      %vm654 = vmor %vm652, %vm653
      %v655 = vsel %vm654, %v647, %v651
      %v656 = vand.u32 2147483647, %v615
      %vm657 = vcmp.eq.f32.partialorder %v656, 8.507059e+37
      %v658 = vand.u32 %v615, 2147483648
      %v659 = vor.u32 1.1754944e-38, %v658
      %v660 = vsel %vm657, %v659, %v655
      %v661 = vmul.f32 1.0, %v660
      %v662 = vrcp.pop %v616
      %v663 = vmul.f32 %v616, %v662
      %v664 = vsub.f32 1.0, %v663
      %v665 = vmul.f32 %v662, %v664
      %v666 = vadd.f32 %v662, %v665
      %vm667 = vweird.f32 %v616
      %vm668 = vweird.f32 %v662
      %vm669 = vmor %vm667, %vm668
      %v670 = vsel %vm669, %v662, %v666
      %v671 = vand.u32 2147483647, %v616
      %vm672 = vcmp.eq.f32.partialorder %v671, 8.507059e+37
      %v673 = vand.u32 %v616, 2147483648
      %v674 = vor.u32 1.1754944e-38, %v673
      %v675 = vsel %vm672, %v674, %v670
      %v676 = vmul.f32 1.0, %v675
      %vm677 = vcmask 7168
      %678 = vst.msk [vmem:[%s252] sm:$0xff] %vm677, %v631
      %679 = vst.msk [vmem:[%s252 + $0x8] sm:$0xff] %vm677, %v646
      %680 = vst.msk [vmem:[%s252 + $0x10] sm:$0xff] %vm677, %v661
      %681 = vst.msk [vmem:[%s252 + $0x18] sm:$0xff] %vm677, %v676
      %p682 = scmp.lt.s32.totalorder %s18, 1
      %s683 = scalar_select %p682, %s18, 1
      %s684 = smul.addr %s683, 4
      %s685 = smul.addr %s684, 8
      %s686 = scalar_lea.vmem %s6, %s685
      // Predicated region
      $region45: #{channel_attention.1} parent=43 // pred_check
        %p687 = pneg %p167
      $region46: #{channel_attention.1} parent=43 // pred_check_branch
        %689 = sbr.rel (%p687) target = $region48
      $region47: #{channel_attention.1} parent=43 // pred_region
        _
      $region48: #{channel_attention.1} parent=43 // pred_fallthru
        _
    $region44: #{channel_attention.1} parent=5 // pred_fallthru
      _
    %p690 = scmp.le.s32.totalorder 2, %s13
    // Predicated region
    $region49: #{channel_attention.1} parent=5 // pred_check
      %p691 = pneg %p690
    $region50: #{channel_attention.1} parent=5 // pred_check_branch
      %693 = sbr.rel (%p691) target = $region52
    $region51: #{channel_attention.1} parent=5 // pred_region
      %s694 = ssub.s32 %s13, 2
      // Predicated region
      $region53: #{channel_attention.1} parent=51 // pred_check
        %p695 = pneg %p173
      $region54: #{channel_attention.1} parent=51 // pred_check_branch
        %697 = sbr.rel (%p695) target = $region56
      $region55: #{channel_attention.1} parent=51 // pred_region
        %p698 = scmp.lt.s32.totalorder %s19, 1
        %s699 = scalar_select %p698, %s19, 1
        %s700 = smul.addr %s699, 4
        %s701 = smul.addr %s700, 8
        %s702 = scalar_lea.vmem %s6, %s701
      $region56: #{channel_attention.1} parent=51 // pred_fallthru
        _
    $region52: #{channel_attention.1} parent=5 // pred_fallthru
      _
  $region6: #{channel_attention.1} parent=0 // loop_footer
    %s17 = sadd.s32 1, %s13
  $region7: #{channel_attention.1} parent=0 // loop_footer_branch
    %12 = sbr.rel target = $region3
  $region8: #{channel_attention.1} parent=0 // loop_exit
    _

</llo_original>
